<compile_context>
chip_gen: v5e
topology: v5e:2x2
jax: 0.10.0
libtpu: 0.0.40
codegen_flags: <defaults>
</compile_context>

<pallas_src>
import jax
import jax.numpy as jnp
from jax.experimental import pallas as pl
from jax.experimental.pallas import tpu as pltpu


# --------------------------------------------------------------------------- #
# Kernel
# --------------------------------------------------------------------------- #
def encoder_kernel(x_ref, w1_ref, b1_ref, w2_ref, b2_ref, w3_ref, b3_ref, o_ref):
    # Cast the streamed x block to the weight compute dtype (bf16) on the VPU;
    # avoids a separate f32->bf16 HBM round trip in the wrapper.
    x = x_ref[...].astype(w1_ref.dtype)

    # fc1 + (dropout: identity in eval) + relu   (bf16 MXU, f32 accumulate)
    h1 = jnp.dot(x, w1_ref[...], preferred_element_type=jnp.float32)
    h1 = jnp.maximum(h1 + b1_ref[...], 0.0).astype(w2_ref.dtype)

    # fc2 + (dropout: identity in eval) + relu
    h2 = jnp.dot(h1, w2_ref[...], preferred_element_type=jnp.float32)
    h2 = jnp.maximum(h2 + b2_ref[...], 0.0).astype(w3_ref.dtype)

    # fc3 (no activation)
    out = jnp.dot(h2, w3_ref[...], preferred_element_type=jnp.float32) + b3_ref[...]
    o_ref[...] = out.astype(o_ref.dtype)


# --------------------------------------------------------------------------- #
# Parameter preparation (pad + cast ONCE, not per forward call)
# --------------------------------------------------------------------------- #
def _round_up(n, m):
    return (n + m - 1) // m * m


def _pad2(a, rows, cols, dtype):
    a = a.astype(dtype)
    return jnp.pad(a, ((0, rows - a.shape[0]), (0, cols - a.shape[1])))


def prepare_encoder_params(params, compute_dtype=jnp.bfloat16):
    """Pad output/contraction dims to 128-multiples and cast weights to bf16.

    Weights are stored (in, out) == W_pytorch.T.  Zero padding rows/cols keeps
    the math bit-identical; the forward wrapper slices padding off the output.
    Run this once at init; its cost is not paid per forward call.
    """
    inp, h = params["w1"].shape
    out = params["w3"].shape[1]
    h_p = _round_up(h, 128)
    out_p = _round_up(out, 128)

    return {
        "inp": inp, "hidden": h, "out": out, "h_p": h_p, "out_p": out_p,
        "compute_dtype": compute_dtype,
        # w1 contraction dim stays at the true INP (block == full dim is legal
        # even when INP is not a multiple of 8/128), so x needs no feature pad.
        "w1": _pad2(params["w1"], inp, h_p, compute_dtype),
        "w2": _pad2(params["w2"], h_p, h_p, compute_dtype),
        "w3": _pad2(params["w3"], h_p, out_p, compute_dtype),
        # Biases stay f32; the add happens on the f32 accumulator.
        "b1": _pad2(params["b1"], 1, h_p, jnp.float32),
        "b2": _pad2(params["b2"], 1, h_p, jnp.float32),
        "b3": _pad2(params["b3"], 1, out_p, jnp.float32),
    }


def _estimate_vmem_bytes(tile, inp, h_p, out_p, x_bytes, w_bytes, out_bytes):
    buf = 2  # Pallas default double-buffering per BlockSpec
    x_tile = tile * inp * x_bytes * buf
    out_tile = tile * out_p * out_bytes * buf
    weights = (inp * h_p + h_p * h_p + h_p * out_p) * w_bytes * buf
    biases = (h_p + h_p + out_p) * 4 * buf
    inter = tile * h_p * 4 * 2  # live f32 intermediates h1/h2
    return x_tile + out_tile + weights + biases + inter


# --------------------------------------------------------------------------- #
# Forward wrapper
# --------------------------------------------------------------------------- #
def encoder_forward(x, prepared, *, batch_tile=512, training=False, out_dtype=None):
    """x: (B, INP) in its natural dtype (typically f32).

    `prepared` comes from prepare_encoder_params().  `out_dtype=jnp.bfloat16`
    halves output writeback bytes if downstream consumers accept bf16.
    """
    assert not training, (
        "Only eval-mode forward is implemented (dropout == identity)."
    )  # TODO(synk): training-mode dropout via pltpu.prng_random_bits.

    B, INP = x.shape
    assert INP == prepared["inp"], "input feature dim mismatch with parameters"
    H_P, OUT_P, OUT = prepared["h_p"], prepared["out_p"], prepared["out"]
    out_dtype = x.dtype if out_dtype is None else out_dtype

    # Adaptive batch tile: never pad a tiny batch up to a huge tile, and split
    # large single-tile batches so the parallel grid axis has >= 2 steps
    # (gives both v7x TensorCores work).
    tile = max(8, min(batch_tile, _round_up(B, 8)))
    if tile >= 256 and _round_up(B, tile) // tile < 2:
        tile = max(128, _round_up((B + 1) // 2, 8))
    B_P = _round_up(B, tile)
    grid = (B_P // tile,)

    # Only the batch rows (if any) are padded -- a cheap, rarely-taken path.
    x_in = x if B_P == B else jnp.pad(x, ((0, B_P - B), (0, 0)))

    # Explicit VMEM budget; raise the scoped limit only when needed.
    vmem_bytes = _estimate_vmem_bytes(
        tile, INP, H_P, OUT_P,
        x_bytes=jnp.dtype(x.dtype).itemsize,
        w_bytes=jnp.dtype(prepared["compute_dtype"]).itemsize,
        out_bytes=jnp.dtype(out_dtype).itemsize,
    )
    cp_kwargs = {}
    if vmem_bytes > (32 << 20):
        # Cap at 128 MiB (v5e/v6e physical). On v7x (64 MiB/TC) a config this
        # large should use the K-tiled fallback noted in the header TODO.
        cp_kwargs["vmem_limit_bytes"] = int(min(vmem_bytes * 12 // 10, 128 << 20))

    def resident(shape):
        # Constant index_map -> DMA'd once and kept resident across grid steps.
        return pl.BlockSpec(shape, lambda i: (0, 0))

    call = pl.pallas_call(
        encoder_kernel,
        out_shape=jax.ShapeDtypeStruct((B_P, OUT_P), out_dtype),
        grid_spec=pltpu.PrefetchScalarGridSpec(
            num_scalar_prefetch=0,
            grid=grid,
            in_specs=[
                pl.BlockSpec((tile, INP), lambda i: (i, 0)),  # x (streamed, natural dtype)
                resident((INP, H_P)),   # w1
                resident((1, H_P)),     # b1
                resident((H_P, H_P)),   # w2
                resident((1, H_P)),     # b2
                resident((H_P, OUT_P)), # w3
                resident((1, OUT_P)),   # b3
            ],
            out_specs=pl.BlockSpec((tile, OUT_P), lambda i: (i, 0)),
        ),
        compiler_params=pltpu.CompilerParams(
            dimension_semantics=("parallel",),
            **cp_kwargs,
        ),
    )

    y_p = call(x_in, prepared["w1"], prepared["b1"], prepared["w2"],
               prepared["b2"], prepared["w3"], prepared["b3"])

    # Skip the un-pad slice (a device copy) when nothing was padded.
    if B_P == B and OUT_P == OUT:
        return y_p
    return y_p[:B, :OUT]


# --------------------------------------------------------------------------- #
# Synthetic params + pure-JAX reference
# --------------------------------------------------------------------------- #
def init_params(key, inp, hidden, out, dtype=jnp.float32):
    """Deterministic synthetic parameters. Weights stored (in, out) == W_pytorch.T."""
    ks = jax.random.split(key, 6)

    def lin(kw, kb, fan_in, fan_out):
        # mimic nn.Linear uniform(-1/sqrt(fan_in), 1/sqrt(fan_in)) init
        bound = 1.0 / jnp.sqrt(jnp.asarray(fan_in, dtype))
        w = jax.random.uniform(kw, (fan_in, fan_out), dtype, -bound, bound)
        b = jax.random.uniform(kb, (1, fan_out), dtype, -bound, bound)
        return w, b

    w1, b1 = lin(ks[0], ks[1], inp, hidden)
    w2, b2 = lin(ks[2], ks[3], hidden, hidden)
    w3, b3 = lin(ks[4], ks[5], hidden, out)
    return {"w1": w1, "b1": b1, "w2": w2, "b2": b2, "w3": w3, "b3": b3}


def encoder_reference(x, p, compute_dtype=jnp.float32):
    """Pure-JAX reference. compute_dtype=bfloat16 mirrors the kernel's precision."""
    cd = compute_dtype
    h = jnp.dot(x.astype(cd), p["w1"].astype(cd),
                preferred_element_type=jnp.float32) + p["b1"]
    h = jnp.maximum(h, 0.0).astype(cd)
    h = jnp.dot(h, p["w2"].astype(cd),
                preferred_element_type=jnp.float32) + p["b2"]
    h = jnp.maximum(h, 0.0).astype(cd)
    return jnp.dot(h, p["w3"].astype(cd),
                   preferred_element_type=jnp.float32) + p["b3"]


# --------------------------------------------------------------------------- #
# Self-test
# --------------------------------------------------------------------------- #
if __name__ == "__main__":
    key = jax.random.PRNGKey(0)
    kx, kp, kx2 = jax.random.split(key, 3)

    # Small shapes consistent with the MLP; deliberately not 128-multiples so
    # the unaligned-INP / padded-hidden / padded-out paths are exercised.
    B, INP, HIDDEN, OUT = 8, 64, 96, 32
    x = jax.random.normal(kx, (B, INP), dtype=jnp.float32)
    params = init_params(kp, INP, HIDDEN, OUT)
    prepared = prepare_encoder_params(params)   # pad + cast once, not per call

    y = encoder_forward(x, prepared)
    y = jax.block_until_ready(y)
    assert y.shape == (B, OUT)

    # Matched-precision reference (bf16 operands, f32 accumulation): tight check.
    y_ref_bf16 = encoder_reference(x, params, compute_dtype=jnp.bfloat16)
    assert jnp.allclose(y, y_ref_bf16, atol=1e-2, rtol=1e-2), "mismatch vs bf16 reference"

    # Full-f32 reference: loose sanity check that bf16 compute stays faithful.
    y_ref_f32 = encoder_reference(x, params, compute_dtype=jnp.float32)
    assert jnp.allclose(y, y_ref_f32, atol=1e-1, rtol=1e-1), "mismatch vs f32 reference"

    # Second config: larger, non-divisible batch -> adaptive tile, batch
    # padding, and a multi-step (>=2) parallel grid axis are exercised.
    B2 = 300
    x2 = jax.random.normal(kx2, (B2, INP), dtype=jnp.float32)
    y2 = jax.block_until_ready(encoder_forward(x2, prepared))
    assert y2.shape == (B2, OUT)
    y2_ref = encoder_reference(x2, params, compute_dtype=jnp.bfloat16)
    assert jnp.allclose(y2, y2_ref, atol=1e-2, rtol=1e-2), "mismatch (large batch)"

    print("KERNEL_OK")
</pallas_src>

<mosaic_0001>
module attributes {stable_mosaic.version = 11 : i64} {
  func.func @encoder_kernel(%arg0: i32, %arg1: memref<8x64xf32, #tpu.memory_space<vmem>>, %arg2: memref<64x128xbf16, #tpu.memory_space<vmem>>, %arg3: memref<1x128xf32, #tpu.memory_space<vmem>>, %arg4: memref<128x128xbf16, #tpu.memory_space<vmem>>, %arg5: memref<1x128xf32, #tpu.memory_space<vmem>>, %arg6: memref<128x128xbf16, #tpu.memory_space<vmem>>, %arg7: memref<1x128xf32, #tpu.memory_space<vmem>>, %arg8: memref<8x128xf32, #tpu.memory_space<vmem>>) attributes {dimension_semantics = [#tpu.dimension_semantics<parallel>], iteration_bounds = array<i64: 1>, scalar_prefetch = 0 : i64, scratch_operands = 0 : i64, tpu.core_type = #tpu.core_type<tc>, window_params = [{transform_indices = @transform_0, window_bounds = array<i64: 8, 64>}, {pipeline_mode = #tpu.pipeline_mode<synchronous>, transform_indices = @transform_1, window_bounds = array<i64: 64, 128>}, {pipeline_mode = #tpu.pipeline_mode<synchronous>, transform_indices = @transform_2, window_bounds = array<i64: 1, 128>}, {pipeline_mode = #tpu.pipeline_mode<synchronous>, transform_indices = @transform_3, window_bounds = array<i64: 128, 128>}, {pipeline_mode = #tpu.pipeline_mode<synchronous>, transform_indices = @transform_4, window_bounds = array<i64: 1, 128>}, {pipeline_mode = #tpu.pipeline_mode<synchronous>, transform_indices = @transform_5, window_bounds = array<i64: 128, 128>}, {pipeline_mode = #tpu.pipeline_mode<synchronous>, transform_indices = @transform_6, window_bounds = array<i64: 1, 128>}, {transform_indices = @transform_7, window_bounds = array<i64: 8, 128>}]} {
    %c0 = arith.constant 0 : index
    %c0_0 = arith.constant 0 : index
    %0 = vector.load %arg1[%c0, %c0_0] : memref<8x64xf32, #tpu.memory_space<vmem>>, vector<8x64xf32>
    %1 = arith.truncf %0 : vector<8x64xf32> to vector<8x64xbf16>
    %c0_1 = arith.constant 0 : index
    %c0_2 = arith.constant 0 : index
    %2 = vector.load %arg2[%c0_1, %c0_2] : memref<64x128xbf16, #tpu.memory_space<vmem>>, vector<64x128xbf16>
    %cst = arith.constant dense<0.000000e+00> : vector<8x128xf32>
    %3 = tpu.matmul %1, %2, %cst {dimension_numbers = #tpu.dot_dimension_numbers<[1], [0], [0], [1], [0, 0, 1, 1], [], []>} : vector<8x64xbf16>, vector<64x128xbf16>, vector<8x128xf32> -> vector<8x128xf32>
    %c0_3 = arith.constant 0 : index
    %c0_4 = arith.constant 0 : index
    %4 = vector.load %arg3[%c0_3, %c0_4] : memref<1x128xf32, #tpu.memory_space<vmem>>, vector<1x128xf32>
    %5 = vector.broadcast %4 : vector<1x128xf32> to vector<8x128xf32>
    %6 = arith.addf %3, %5 : vector<8x128xf32>
    %cst_5 = arith.constant 0.000000e+00 : f32
    %7 = vector.broadcast %cst_5 : f32 to vector<8x128xf32>
    %8 = arith.maximumf %6, %7 : vector<8x128xf32>
    %9 = arith.truncf %8 : vector<8x128xf32> to vector<8x128xbf16>
    %c0_6 = arith.constant 0 : index
    %c0_7 = arith.constant 0 : index
    %10 = vector.load %arg4[%c0_6, %c0_7] : memref<128x128xbf16, #tpu.memory_space<vmem>>, vector<128x128xbf16>
    %cst_8 = arith.constant dense<0.000000e+00> : vector<8x128xf32>
    %11 = tpu.matmul %9, %10, %cst_8 {dimension_numbers = #tpu.dot_dimension_numbers<[1], [0], [0], [1], [0, 0, 1, 1], [], []>} : vector<8x128xbf16>, vector<128x128xbf16>, vector<8x128xf32> -> vector<8x128xf32>
    %c0_9 = arith.constant 0 : index
    %c0_10 = arith.constant 0 : index
    %12 = vector.load %arg5[%c0_9, %c0_10] : memref<1x128xf32, #tpu.memory_space<vmem>>, vector<1x128xf32>
    %13 = vector.broadcast %12 : vector<1x128xf32> to vector<8x128xf32>
    %14 = arith.addf %11, %13 : vector<8x128xf32>
    %cst_11 = arith.constant 0.000000e+00 : f32
    %15 = vector.broadcast %cst_11 : f32 to vector<8x128xf32>
    %16 = arith.maximumf %14, %15 : vector<8x128xf32>
    %17 = arith.truncf %16 : vector<8x128xf32> to vector<8x128xbf16>
    %c0_12 = arith.constant 0 : index
    %c0_13 = arith.constant 0 : index
    %18 = vector.load %arg6[%c0_12, %c0_13] : memref<128x128xbf16, #tpu.memory_space<vmem>>, vector<128x128xbf16>
    %cst_14 = arith.constant dense<0.000000e+00> : vector<8x128xf32>
    %19 = tpu.matmul %17, %18, %cst_14 {dimension_numbers = #tpu.dot_dimension_numbers<[1], [0], [0], [1], [0, 0, 1, 1], [], []>} : vector<8x128xbf16>, vector<128x128xbf16>, vector<8x128xf32> -> vector<8x128xf32>
    %c0_15 = arith.constant 0 : index
    %c0_16 = arith.constant 0 : index
    %20 = vector.load %arg7[%c0_15, %c0_16] : memref<1x128xf32, #tpu.memory_space<vmem>>, vector<1x128xf32>
    %21 = vector.broadcast %20 : vector<1x128xf32> to vector<8x128xf32>
    %22 = arith.addf %19, %21 : vector<8x128xf32>
    %c0_17 = arith.constant 0 : index
    %c0_18 = arith.constant 0 : index
    %23 = vector.load %arg8[%c0_17, %c0_18] : memref<8x128xf32, #tpu.memory_space<vmem>>, vector<8x128xf32>
    tpu.vector_store %arg8[%c0_17, %c0_18], %22 {strides = array<i32>} : memref<8x128xf32, #tpu.memory_space<vmem>>, vector<8x128xf32>,
    return
  }
  func.func @transform_0(%arg0: i32) -> (i32, i32) {
    %c0_i32 = arith.constant 0 : i32
    %c0_i32_0 = arith.constant 0 : i32
    return %arg0, %c0_i32 : i32, i32
  }
  func.func @transform_1(%arg0: i32) -> (i32, i32) {
    %c0_i32 = arith.constant 0 : i32
    %c0_i32_0 = arith.constant 0 : i32
    %c0_i32_1 = arith.constant 0 : i32
    return %c0_i32, %c0_i32_0 : i32, i32
  }
  func.func @transform_2(%arg0: i32) -> (i32, i32) {
    %c0_i32 = arith.constant 0 : i32
    %c0_i32_0 = arith.constant 0 : i32
    %c0_i32_1 = arith.constant 0 : i32
    return %c0_i32, %c0_i32_0 : i32, i32
  }
  func.func @transform_3(%arg0: i32) -> (i32, i32) {
    %c0_i32 = arith.constant 0 : i32
    %c0_i32_0 = arith.constant 0 : i32
    %c0_i32_1 = arith.constant 0 : i32
    return %c0_i32, %c0_i32_0 : i32, i32
  }
  func.func @transform_4(%arg0: i32) -> (i32, i32) {
    %c0_i32 = arith.constant 0 : i32
    %c0_i32_0 = arith.constant 0 : i32
    %c0_i32_1 = arith.constant 0 : i32
    return %c0_i32, %c0_i32_0 : i32, i32
  }
  func.func @transform_5(%arg0: i32) -> (i32, i32) {
    %c0_i32 = arith.constant 0 : i32
    %c0_i32_0 = arith.constant 0 : i32
    %c0_i32_1 = arith.constant 0 : i32
    return %c0_i32, %c0_i32_0 : i32, i32
  }
  func.func @transform_6(%arg0: i32) -> (i32, i32) {
    %c0_i32 = arith.constant 0 : i32
    %c0_i32_0 = arith.constant 0 : i32
    %c0_i32_1 = arith.constant 0 : i32
    return %c0_i32, %c0_i32_0 : i32, i32
  }
  func.func @transform_7(%arg0: i32) -> (i32, i32) {
    %c0_i32 = arith.constant 0 : i32
    %c0_i32_0 = arith.constant 0 : i32
    return %arg0, %c0_i32 : i32, i32
  }
}

</mosaic_0001>

<llo_original>
// kernel: tpu_custom_call.1
$region0: #{tpu_custom_call.1}
  #allocation0 [shape = 'u32[]', space=smem, size = 0x4, offset = 0x4, fixed_abs, tag = 'smem constant byte address 0x4 - core index']
  #allocation1 [shape = 'u32[72,128]{1,0:T(1,128)}', space=vmem, size = 0x9000, scoped, tag = 'internal scratch']
  %s0 = inlined_call_operand.hbm [shape: f32[8,64], index: 0, kind: input, shape index: {}]
  %s1 = inlined_call_operand.hbm [shape: bf16[64,128], index: 1, kind: input, shape index: {}]
  %s2 = inlined_call_operand.vmem [shape: f32[1,128], index: 2, kind: input, shape index: {}]
  %s3 = inlined_call_operand.hbm [shape: bf16[128,128], index: 3, kind: input, shape index: {}]
  %s4 = inlined_call_operand.vmem [shape: f32[1,128], index: 4, kind: input, shape index: {}]
  %s5 = inlined_call_operand.hbm [shape: bf16[128,128], index: 5, kind: input, shape index: {}]
  %s6 = inlined_call_operand.vmem [shape: f32[1,128], index: 6, kind: input, shape index: {}]
  %s7 = inlined_call_operand.hbm [shape: f32[8,128], index: 7, kind: output, shape index: {}]
  %s8 = sld [smem:[#allocation0]]
  $region54: #{tpu_custom_call.1} parent=0
    _
  %s10 = ssub.s32 1, %s8
  %s11 = scalar_select 0, %s10, %s8
  $region1: #{tpu_custom_call.1} parent=0
    #allocation2 [shape = 'u8[4096]{0}', space=vmem, size = 0x1000, scoped, tag = 'input window, operand 0, single buffered']
    #allocation3 [shape = 's32[1]{0}', space=sflag, size = 0x4, scoped, tag = 'scoped memory for tpu_custom_call.1']
    #allocation4 [shape = 's32[1]{0}', space=sflag, size = 0x4, scoped, tag = 'scoped memory for tpu_custom_call.1']
    #allocation5 [shape = 'u8[16384]{0}', space=vmem, size = 0x4000, scoped, tag = 'input window, operand 1, single buffered']
    #allocation6 [shape = 's32[1]{0}', space=sflag, size = 0x4, scoped, tag = 'scoped memory for tpu_custom_call.1']
    #allocation7 [shape = 'u8[32768]{0}', space=vmem, size = 0x8000, scoped, tag = 'input window, operand 3, single buffered']
    #allocation8 [shape = 'u8[32768]{0}', space=vmem, size = 0x8000, scoped, tag = 'input window, operand 5, single buffered']
    #allocation9 [shape = 's32[1]{0}', space=sflag, size = 0x4, scoped, tag = 'scoped memory for tpu_custom_call.1']
    #allocation10 [shape = 'u8[4096]{0}', space=vmem, size = 0x1000, scoped, tag = 'output window, operand 0, single buffered']
    %12 = vsyncpa [#allocation3], 0
    %13 = vsyncpa [#allocation6], 0
    %14 = vsyncpa [#allocation9], 0
    %15 = vsyncpa [#allocation4], 0
    // Predicated region
    $region2: #{tpu_custom_call.1} parent=1 // pred_check
      _
    $region3: #{tpu_custom_call.1} parent=1 // pred_check_branch
      %17 = sbr.rel (0) target = $region5
    $region4: #{tpu_custom_call.1} parent=1 // pred_region
      %19 = vsyncadd [#allocation3], 0
      %s21 = sshll.u32 %s0, 4
      %s22 = int_to_ptr.hbm [resolvable:$true] %s21
      %s23 = sshll.u32 [#allocation2], 4
      %s24 = int_to_ptr.vmem [resolvable:$true] %s23
      %26 = dma.hbm_to_vmem [thread:$0]  %s22, 128, %s24, [#allocation3]
    $region5: #{tpu_custom_call.1} parent=1 // pred_fallthru
      _
    // Predicated region
    $region6: #{tpu_custom_call.1} parent=1 // pred_check
      _
    $region7: #{tpu_custom_call.1} parent=1 // pred_check_branch
      %28 = sbr.rel (0) target = $region9
    $region8: #{tpu_custom_call.1} parent=1 // pred_region
      %30 = vsyncadd [#allocation6], 0
      %s31 = sshll.u32 %s1, 4
      %s32 = int_to_ptr.hbm [resolvable:$true] %s31
      %s33 = sshll.u32 [#allocation5], 4
      %s34 = int_to_ptr.vmem [resolvable:$true] %s33
      %39 = dma.hbm_to_vmem [thread:$0]  %s32, 512, %s34, [#allocation6], 64, 64, 4
    $region9: #{tpu_custom_call.1} parent=1 // pred_fallthru
      _
    // Predicated region
    $region10: #{tpu_custom_call.1} parent=1 // pred_check
      _
    $region11: #{tpu_custom_call.1} parent=1 // pred_check_branch
      %41 = sbr.rel (0) target = $region13
    $region12: #{tpu_custom_call.1} parent=1 // pred_region
      _
    $region13: #{tpu_custom_call.1} parent=1 // pred_fallthru
      _
    // Predicated region
    $region14: #{tpu_custom_call.1} parent=1 // pred_check
      _
    $region15: #{tpu_custom_call.1} parent=1 // pred_check_branch
      %43 = sbr.rel (0) target = $region17
    $region16: #{tpu_custom_call.1} parent=1 // pred_region
      %45 = vsyncadd [#allocation6], 0
      %s46 = sshll.u32 %s3, 4
      %s47 = int_to_ptr.hbm [resolvable:$true] %s46
      %s48 = sshll.u32 [#allocation7], 4
      %s49 = int_to_ptr.vmem [resolvable:$true] %s48
      %54 = dma.hbm_to_vmem [thread:$0]  %s47, 1024, %s49, [#allocation6], 64, 64, 4
    $region17: #{tpu_custom_call.1} parent=1 // pred_fallthru
      _
    // Predicated region
    $region18: #{tpu_custom_call.1} parent=1 // pred_check
      _
    $region19: #{tpu_custom_call.1} parent=1 // pred_check_branch
      %56 = sbr.rel (0) target = $region21
    $region20: #{tpu_custom_call.1} parent=1 // pred_region
      _
    $region21: #{tpu_custom_call.1} parent=1 // pred_fallthru
      _
    // Predicated region
    $region22: #{tpu_custom_call.1} parent=1 // pred_check
      _
    $region23: #{tpu_custom_call.1} parent=1 // pred_check_branch
      %58 = sbr.rel (0) target = $region25
    $region24: #{tpu_custom_call.1} parent=1 // pred_region
      %60 = vsyncadd [#allocation9], 0
      %s61 = sshll.u32 %s5, 4
      %s62 = int_to_ptr.hbm [resolvable:$true] %s61
      %s63 = sshll.u32 [#allocation8], 4
      %s64 = int_to_ptr.vmem [resolvable:$true] %s63
      %69 = dma.hbm_to_vmem [thread:$0]  %s62, 1024, %s64, [#allocation9], 64, 64, 4
    $region25: #{tpu_custom_call.1} parent=1 // pred_fallthru
      _
    // Predicated region
    $region26: #{tpu_custom_call.1} parent=1 // pred_check
      _
    $region27: #{tpu_custom_call.1} parent=1 // pred_check_branch
      %71 = sbr.rel (0) target = $region29
    $region28: #{tpu_custom_call.1} parent=1 // pred_region
      _
    $region29: #{tpu_custom_call.1} parent=1 // pred_fallthru
      _
    // Predicated region
    $region30: #{tpu_custom_call.1} parent=1 // pred_check
      _
    $region31: #{tpu_custom_call.1} parent=1 // pred_check_branch
      %73 = sbr.rel (0) target = $region33
    $region32: #{tpu_custom_call.1} parent=1 // pred_region
      %75 = dma.done [#allocation3], 128
    $region33: #{tpu_custom_call.1} parent=1 // pred_fallthru
      _
    // Predicated region
    $region34: #{tpu_custom_call.1} parent=1 // pred_check
      _
    $region35: #{tpu_custom_call.1} parent=1 // pred_check_branch
      %77 = sbr.rel (0) target = $region37
    $region36: #{tpu_custom_call.1} parent=1 // pred_region
      %79 = dma.done [#allocation6], 512
    $region37: #{tpu_custom_call.1} parent=1 // pred_fallthru
      _
    // Predicated region
    $region38: #{tpu_custom_call.1} parent=1 // pred_check
      _
    $region39: #{tpu_custom_call.1} parent=1 // pred_check_branch
      %81 = sbr.rel (0) target = $region41
    $region40: #{tpu_custom_call.1} parent=1 // pred_region
      %83 = dma.done [#allocation6], 1024
    $region41: #{tpu_custom_call.1} parent=1 // pred_fallthru
      _
    // Predicated region
    $region42: #{tpu_custom_call.1} parent=1 // pred_check
      _
    $region43: #{tpu_custom_call.1} parent=1 // pred_check_branch
      %85 = sbr.rel (0) target = $region45
    $region44: #{tpu_custom_call.1} parent=1 // pred_region
      %87 = dma.done [#allocation9], 1024
    $region45: #{tpu_custom_call.1} parent=1 // pred_fallthru
      _
    %v89 = vld [vmem:[#allocation2] sm:$0xff]
    %v90 = vpack.c.bf16 %v89, %v89
    %v91 = vld [vmem:[#allocation5] sm:$0xf]
    %v92 = vld [vmem:[#allocation5 + $0x4] sm:$0xf]
    %v93 = vld [vmem:[#allocation5 + $0x8] sm:$0xf]
    %v94 = vld [vmem:[#allocation5 + $0xc] sm:$0xf]
    %v95 = vld [vmem:[#allocation5 + $0x10] sm:$0xf]
    %v96 = vld [vmem:[#allocation5 + $0x14] sm:$0xf]
    %v97 = vld [vmem:[#allocation5 + $0x18] sm:$0xf]
    %v98 = vld [vmem:[#allocation5 + $0x1c] sm:$0xf]
    %v99 = vld [vmem:[%s2] sm:$0x1]
    %v101 = vperm.slane %v99, 0
    %v111 = vunpack.c.l.b16 %v91
    %v112 = vunpack.c.l.b16 %v92
    %v113 = vunpack.c.l.b16 %v93
    %v114 = vunpack.c.l.b16 %v94
    %v115 = vunpack.c.l.b16 %v95
    %v116 = vunpack.c.l.b16 %v96
    %v117 = vunpack.c.l.b16 %v97
    %v118 = vunpack.c.l.b16 %v98
    %v119 = vpack.c.b16 %v112, %v111
    %v120 = vpack.c.b16 %v114, %v113
    %v121 = vpack.c.b16 %v116, %v115
    %v122 = vpack.c.b16 %v118, %v117
    %vm127 = vcmask 523264
    %v129 = vsel %vm127, %v90, 0
    %131 = vmatpush.bf16.msra.mxu0 0
    %132 = vmatpush.bf16.msra.mxu0 0
    %133 = vmatpush.bf16.msra.mxu0 0
    %134 = vmatpush.bf16.msra.mxu0 0
    %135 = vmatpush.bf16.msra.mxu0 %v122
    %136 = vmatpush.bf16.msra.mxu0 %v121
    %137 = vmatpush.bf16.msra.mxu0 %v120
    %138 = vmatpush.bf16.msra.mxu0 %v119
    %139 = vmatmul.bf16.gmra.mxu0 %v129
    %v140 = vpop.f32.mrf.mxu0
    %v141 = vadd.f32 %v101, %v140
    %v142 = vpop.f32.mrf.mxu0
    %143 = vdwg.mxu0
    %v144 = vmax.f32 %v141, 0.0
    %v145 = vpack.c.bf16 %v144, %v144
    %v146 = vld [vmem:[#allocation7] sm:$0xf]
    %v147 = vld [vmem:[#allocation7 + $0x4] sm:$0xf]
    %v148 = vld [vmem:[#allocation7 + $0x8] sm:$0xf]
    %v149 = vld [vmem:[#allocation7 + $0xc] sm:$0xf]
    %v150 = vld [vmem:[#allocation7 + $0x10] sm:$0xf]
    %v151 = vld [vmem:[#allocation7 + $0x14] sm:$0xf]
    %v152 = vld [vmem:[#allocation7 + $0x18] sm:$0xf]
    %v153 = vld [vmem:[#allocation7 + $0x1c] sm:$0xf]
    %v154 = vld [vmem:[#allocation7 + $0x20] sm:$0xf]
    %v155 = vld [vmem:[#allocation7 + $0x24] sm:$0xf]
    %v156 = vld [vmem:[#allocation7 + $0x28] sm:$0xf]
    %v157 = vld [vmem:[#allocation7 + $0x2c] sm:$0xf]
    %v158 = vld [vmem:[#allocation7 + $0x30] sm:$0xf]
    %v159 = vld [vmem:[#allocation7 + $0x34] sm:$0xf]
    %v160 = vld [vmem:[#allocation7 + $0x38] sm:$0xf]
    %v161 = vld [vmem:[#allocation7 + $0x3c] sm:$0xf]
    %v162 = vld [vmem:[%s4] sm:$0x1]
    %v164 = vperm.slane %v162, 0
    %v182 = vunpack.c.l.b16 %v146
    %v183 = vunpack.c.l.b16 %v147
    %v184 = vunpack.c.l.b16 %v148
    %v185 = vunpack.c.l.b16 %v149
    %v186 = vunpack.c.l.b16 %v150
    %v187 = vunpack.c.l.b16 %v151
    %v188 = vunpack.c.l.b16 %v152
    %v189 = vunpack.c.l.b16 %v153
    %v190 = vunpack.c.l.b16 %v154
    %v191 = vunpack.c.l.b16 %v155
    %v192 = vunpack.c.l.b16 %v156
    %v193 = vunpack.c.l.b16 %v157
    %v194 = vunpack.c.l.b16 %v158
    %v195 = vunpack.c.l.b16 %v159
    %v196 = vunpack.c.l.b16 %v160
    %v197 = vunpack.c.l.b16 %v161
    %v198 = vpack.c.b16 %v183, %v182
    %v199 = vpack.c.b16 %v185, %v184
    %v200 = vpack.c.b16 %v187, %v186
    %v201 = vpack.c.b16 %v189, %v188
    %v202 = vpack.c.b16 %v191, %v190
    %v203 = vpack.c.b16 %v193, %v192
    %v204 = vpack.c.b16 %v195, %v194
    %v205 = vpack.c.b16 %v197, %v196
    %214 = vmatpush.bf16.msra.mxu0 %v205
    %215 = vmatpush.bf16.msra.mxu0 %v204
    %216 = vmatpush.bf16.msra.mxu0 %v203
    %217 = vmatpush.bf16.msra.mxu0 %v202
    %218 = vmatpush.bf16.msra.mxu0 %v201
    %219 = vmatpush.bf16.msra.mxu0 %v200
    %220 = vmatpush.bf16.msra.mxu0 %v199
    %221 = vmatpush.bf16.msra.mxu0 %v198
    %222 = vmatmul.bf16.gmra.mxu0 %v145
    %v223 = vpop.f32.mrf.mxu0
    %v224 = vadd.f32 %v164, %v223
    %v225 = vpop.f32.mrf.mxu0
    %226 = vdwg.mxu0
    %v227 = vmax.f32 %v224, 0.0
    %v228 = vpack.c.bf16 %v227, %v227
    %v229 = vld [vmem:[#allocation8] sm:$0xf]
    %v230 = vld [vmem:[#allocation8 + $0x4] sm:$0xf]
    %v231 = vld [vmem:[#allocation8 + $0x8] sm:$0xf]
    %v232 = vld [vmem:[#allocation8 + $0xc] sm:$0xf]
    %v233 = vld [vmem:[#allocation8 + $0x10] sm:$0xf]
    %v234 = vld [vmem:[#allocation8 + $0x14] sm:$0xf]
    %v235 = vld [vmem:[#allocation8 + $0x18] sm:$0xf]
    %v236 = vld [vmem:[#allocation8 + $0x1c] sm:$0xf]
    %v237 = vld [vmem:[#allocation8 + $0x20] sm:$0xf]
    %v238 = vld [vmem:[#allocation8 + $0x24] sm:$0xf]
    %v239 = vld [vmem:[#allocation8 + $0x28] sm:$0xf]
    %v240 = vld [vmem:[#allocation8 + $0x2c] sm:$0xf]
    %v241 = vld [vmem:[#allocation8 + $0x30] sm:$0xf]
    %v242 = vld [vmem:[#allocation8 + $0x34] sm:$0xf]
    %v243 = vld [vmem:[#allocation8 + $0x38] sm:$0xf]
    %v244 = vld [vmem:[#allocation8 + $0x3c] sm:$0xf]
    %v245 = vld [vmem:[%s6] sm:$0x1]
    %v247 = vperm.slane %v245, 0
    %v265 = vunpack.c.l.b16 %v229
    %v266 = vunpack.c.l.b16 %v230
    %v267 = vunpack.c.l.b16 %v231
    %v268 = vunpack.c.l.b16 %v232
    %v269 = vunpack.c.l.b16 %v233
    %v270 = vunpack.c.l.b16 %v234
    %v271 = vunpack.c.l.b16 %v235
    %v272 = vunpack.c.l.b16 %v236
    %v273 = vunpack.c.l.b16 %v237
    %v274 = vunpack.c.l.b16 %v238
    %v275 = vunpack.c.l.b16 %v239
    %v276 = vunpack.c.l.b16 %v240
    %v277 = vunpack.c.l.b16 %v241
    %v278 = vunpack.c.l.b16 %v242
    %v279 = vunpack.c.l.b16 %v243
    %v280 = vunpack.c.l.b16 %v244
    %v281 = vpack.c.b16 %v266, %v265
    %v282 = vpack.c.b16 %v268, %v267
    %v283 = vpack.c.b16 %v270, %v269
    %v284 = vpack.c.b16 %v272, %v271
    %v285 = vpack.c.b16 %v274, %v273
    %v286 = vpack.c.b16 %v276, %v275
    %v287 = vpack.c.b16 %v278, %v277
    %v288 = vpack.c.b16 %v280, %v279
    %297 = vmatpush.bf16.msra.mxu0 %v288
    %298 = vmatpush.bf16.msra.mxu0 %v287
    %299 = vmatpush.bf16.msra.mxu0 %v286
    %300 = vmatpush.bf16.msra.mxu0 %v285
    %301 = vmatpush.bf16.msra.mxu0 %v284
    %302 = vmatpush.bf16.msra.mxu0 %v283
    %303 = vmatpush.bf16.msra.mxu0 %v282
    %304 = vmatpush.bf16.msra.mxu0 %v281
    %305 = vmatmul.bf16.gmra.mxu0 %v228
    %v306 = vpop.f32.mrf.mxu0
    %v307 = vadd.f32 %v247, %v306
    %v308 = vpop.f32.mrf.mxu0
    %309 = vdwg.mxu0
    %310 = vst [vmem:[#allocation10] sm:$0xff] %v307
    // Predicated region
    $region46: #{tpu_custom_call.1} parent=1 // pred_check
      _
    $region47: #{tpu_custom_call.1} parent=1 // pred_check_branch
      %312 = sbr.rel (0) target = $region49
    $region48: #{tpu_custom_call.1} parent=1 // pred_region
      %314 = vsyncadd [#allocation4], 0
      %s316 = sshll.u32 [#allocation10], 4
      %s317 = int_to_ptr.vmem [resolvable:$true] %s316
      %s318 = sshll.u32 %s7, 4
      %s319 = int_to_ptr.hbm [resolvable:$true] %s318
      %321 = dma.vmem_to_hbm [thread:$0]  %s317, 128, %s319, [#allocation4]
    $region49: #{tpu_custom_call.1} parent=1 // pred_fallthru
      _
    // Predicated region
    $region50: #{tpu_custom_call.1} parent=1 // pred_check
      _
    $region51: #{tpu_custom_call.1} parent=1 // pred_check_branch
      %323 = sbr.rel (0) target = $region53
    $region52: #{tpu_custom_call.1} parent=1 // pred_region
      %325 = dma.done [#allocation4], 128
    $region53: #{tpu_custom_call.1} parent=1 // pred_fallthru
      _
    %326 = vsyncpa [#allocation3], 1
    %327 = vsyncpa [#allocation6], 1
    %328 = vsyncpa [#allocation9], 1
    %329 = vsyncpa [#allocation4], 1

</llo_original>
